<compile_context>
chip_gen: v7x
topology: tpu7x:2x2x1
jax: 0.10.0
libtpu: 0.0.40
codegen_flags: <defaults>
</compile_context>

<pallas_src>
import functools

import jax
import jax.numpy as jnp
from jax.experimental import pallas as pl
from jax.experimental.pallas import tpu as pltpu

_LANES = 128
_SUBLANES = 8


def _bce_kernel(inv_numel, x_ref, t_ref, out_ref, acc_ref):
    i = pl.program_id(0)

    @pl.when(i == 0)
    def _():
        # acc[0]: num_pos, acc[1]: num_neg,
        # acc[2]: sum(elem * pos), acc[3]: sum(elem * neg)
        acc_ref[...] = jnp.zeros_like(acc_ref)

    x = x_ref[...].astype(jnp.float32)
    t = t_ref[...].astype(jnp.float32)

    pos = (t == 1.0).astype(jnp.float32)
    neg = (t == 0.0).astype(jnp.float32)

    # Numerically-stable BCE-with-logits elementwise term:
    #   max(x, 0) - x*t + log1p(exp(-|x|))
    elem = jnp.maximum(x, 0.0) - x * t + jnp.log1p(jnp.exp(-jnp.abs(x)))

    br = x.shape[0]

    def fold(v):
        # (br, 128) -> (8, 128) by summing whole vregs: pure VPU adds,
        # no cross-lane / cross-sublane (XLU) traffic per step.
        return jnp.sum(v.reshape(br // _SUBLANES, _SUBLANES, _LANES), axis=0)

    acc_ref[0] += fold(pos)
    acc_ref[1] += fold(neg)
    acc_ref[2] += fold(elem * pos)
    acc_ref[3] += fold(elem * neg)

    @pl.when(i == pl.num_programs(0) - 1)
    def _():
        num_pos = jnp.sum(acc_ref[0])
        num_neg = jnp.sum(acc_ref[1])
        num_total = num_pos + num_neg
        alpha = num_neg / num_total
        beta = 1.1 * num_pos / num_total
        # weights = alpha*pos + beta*neg  =>  weighted sum splits into two
        # terms; PyTorch 'mean' reduction divides by the total element count.
        out_ref[0, 0] = (
            alpha * jnp.sum(acc_ref[2]) + beta * jnp.sum(acc_ref[3])
        ) * inv_numel


def bce_loss(input_nchw, target_nchw, *, block_rows=4096):
    assert input_nchw.shape == target_nchw.shape
    numel = input_nchw.size
    assert numel > 0

    x_flat = input_nchw.reshape(-1)
    t_flat = target_nchw.reshape(-1)
    if not jnp.issubdtype(t_flat.dtype, jnp.floating):
        t_flat = t_flat.astype(jnp.float32)

    # Cap the double-buffered VMEM footprint:
    #   2 inputs x 2 buffers x (br x 128 x 4B) <= 16 MiB  ->  br <= 8192.
    block_rows = int(max(_SUBLANES, min(block_rows, 8192)))
    block_rows = (block_rows // _SUBLANES) * _SUBLANES

    rows_raw = pl.cdiv(numel, _LANES)
    br = min(block_rows, pl.cdiv(rows_raw, _SUBLANES) * _SUBLANES)
    rows = pl.cdiv(rows_raw, br) * br
    padded_len = rows * _LANES

    pad = padded_len - numel
    if pad:
        # Padded targets = -1: neither pos nor neg, so weight == 0 and the
        # padded elements contribute nothing to counts or to the loss sum.
        x_flat = jnp.concatenate([x_flat, jnp.zeros((pad,), x_flat.dtype)])
        t_flat = jnp.concatenate(
            [t_flat, jnp.full((pad,), -1.0, t_flat.dtype)])

    x2 = x_flat.reshape(rows, _LANES)
    t2 = t_flat.reshape(rows, _LANES)
    grid = (rows // br,)

    kernel = functools.partial(_bce_kernel, 1.0 / float(numel))

    out = pl.pallas_call(
        kernel,
        out_shape=jax.ShapeDtypeStruct((1, 1), jnp.float32),
        grid_spec=pltpu.PrefetchScalarGridSpec(
            num_scalar_prefetch=0,
            grid=grid,
            in_specs=[
                pl.BlockSpec((br, _LANES), lambda i: (i, 0)),
                pl.BlockSpec((br, _LANES), lambda i: (i, 0)),
            ],
            out_specs=pl.BlockSpec(memory_space=pltpu.SMEM),
            scratch_shapes=[pltpu.VMEM((4, _SUBLANES, _LANES), jnp.float32)],
        ),
        compiler_params=pltpu.CompilerParams(
            dimension_semantics=("arbitrary",)),
    )(x2, t2)
    return out[0, 0]


def _bce_loss_ref(x, t):
    # Pure-JAX reference mirroring the PyTorch module.
    x = x.astype(jnp.float32)
    t = t.astype(jnp.float32)
    pos = (t == 1.0).astype(jnp.float32)
    neg = (t == 0.0).astype(jnp.float32)
    num_pos = jnp.sum(pos)
    num_neg = jnp.sum(neg)
    num_total = num_pos + num_neg
    alpha = num_neg / num_total
    beta = 1.1 * num_pos / num_total
    weights = alpha * pos + beta * neg
    elem = jnp.maximum(x, 0.0) - x * t + jnp.log1p(jnp.exp(-jnp.abs(x)))
    return jnp.mean(weights * elem)


if __name__ == "__main__":
    key = jax.random.PRNGKey(0)
    k1, k2, k3, k4 = jax.random.split(key, 4)

    # Shapes implied by the module: NCHW logits + binary target map.
    N, C, H, W = 2, 4, 16, 16  # 2048 elements = 16 x 128 lanes
    logits = jax.random.normal(k1, (N, C, H, W), dtype=jnp.float32)
    target = jax.random.bernoulli(
        k2, p=0.3, shape=(N, C, H, W)).astype(jnp.float32)

    loss = jax.block_until_ready(bce_loss(logits, target))
    ref = _bce_loss_ref(logits, target)
    assert jnp.allclose(loss, ref, rtol=1e-5, atol=1e-6), (loss, ref)

    # Awkward shape (exercises the padding + invalid-target masking path).
    shp2 = (2, 3, 7, 5)  # 210 elements, not a multiple of 128
    logits2 = jax.random.normal(k3, shp2, dtype=jnp.float32)
    target2 = jax.random.bernoulli(k4, p=0.5, shape=shp2).astype(jnp.float32)

    loss2 = jax.block_until_ready(bce_loss(logits2, target2))
    ref2 = _bce_loss_ref(logits2, target2)
    assert jnp.allclose(loss2, ref2, rtol=1e-5, atol=1e-6), (loss2, ref2)

    print("KERNEL_OK")
</pallas_src>

<mosaic_0001>
module attributes {stable_mosaic.version = 11 : i64} {
  func.func @_bce_kernel(%arg0: i32, %arg1: memref<16x128xf32, #tpu.memory_space<vmem>>, %arg2: memref<16x128xf32, #tpu.memory_space<vmem>>, %arg3: memref<1x1xf32, #tpu.memory_space<smem>>, %arg4: memref<4x8x128xf32, #tpu.memory_space<vmem>>) attributes {dimension_semantics = [#tpu.dimension_semantics<arbitrary>], iteration_bounds = array<i64: 1>, scalar_prefetch = 0 : i64, scratch_operands = 1 : i64, tpu.core_type = #tpu.core_type<tc>, window_params = [{transform_indices = @transform_0, window_bounds = array<i64: 16, 128>}, {transform_indices = @transform_1, window_bounds = array<i64: 16, 128>}, {transform_indices = @transform_2, window_bounds = array<i64: 1, 1>}]} {
    %c0_i32 = arith.constant 0 : i32
    %0 = arith.cmpi eq, %arg0, %c0_i32 : i32
    %1 = arith.extui %0 : i1 to i32
    %c0_i32_0 = arith.constant 0 : i32
    %2 = arith.cmpi ne, %1, %c0_i32_0 : i32
    scf.if %2 {
      %cst_34 = arith.constant 0.000000e+00 : f32
      %60 = vector.broadcast %cst_34 : f32 to vector<4x8x128xf32>
      %c0_35 = arith.constant 0 : index
      %c0_36 = arith.constant 0 : index
      %c0_37 = arith.constant 0 : index
      %61 = vector.load %arg4[%c0_35, %c0_36, %c0_37] : memref<4x8x128xf32, #tpu.memory_space<vmem>>, vector<4x8x128xf32>
      tpu.vector_store %arg4[%c0_35, %c0_36, %c0_37], %60 {strides = array<i32>} : memref<4x8x128xf32, #tpu.memory_space<vmem>>, vector<4x8x128xf32>,
    } else {
    }
    %c0 = arith.constant 0 : index
    %c0_1 = arith.constant 0 : index
    %3 = vector.load %arg1[%c0, %c0_1] : memref<16x128xf32, #tpu.memory_space<vmem>>, vector<16x128xf32>
    %c0_2 = arith.constant 0 : index
    %c0_3 = arith.constant 0 : index
    %4 = vector.load %arg2[%c0_2, %c0_3] : memref<16x128xf32, #tpu.memory_space<vmem>>, vector<16x128xf32>
    %cst = arith.constant 1.000000e+00 : f32
    %5 = vector.broadcast %cst : f32 to vector<16x128xf32>
    %6 = arith.cmpf oeq, %4, %5 : vector<16x128xf32>
    %7 = arith.extui %6 : vector<16x128xi1> to vector<16x128xi32>
    %8 = arith.sitofp %7 : vector<16x128xi32> to vector<16x128xf32>
    %cst_4 = arith.constant 0.000000e+00 : f32
    %9 = vector.broadcast %cst_4 : f32 to vector<16x128xf32>
    %10 = arith.cmpf oeq, %4, %9 : vector<16x128xf32>
    %11 = arith.extui %10 : vector<16x128xi1> to vector<16x128xi32>
    %12 = arith.sitofp %11 : vector<16x128xi32> to vector<16x128xf32>
    %cst_5 = arith.constant 0.000000e+00 : f32
    %13 = vector.broadcast %cst_5 : f32 to vector<16x128xf32>
    %14 = arith.maximumf %3, %13 : vector<16x128xf32>
    %15 = arith.mulf %3, %4 : vector<16x128xf32>
    %16 = arith.subf %14, %15 : vector<16x128xf32>
    %17 = math.absf %3 : vector<16x128xf32>
    %cst_6 = arith.constant 0.000000e+00 : f32
    %18 = vector.broadcast %cst_6 : f32 to vector<16x128xf32>
    %19 = arith.subf %18, %17 : vector<16x128xf32>
    %20 = math.exp %19 : vector<16x128xf32>
    %21 = math.log1p %20 : vector<16x128xf32>
    %22 = arith.addf %16, %21 : vector<16x128xf32>
    %c0_7 = arith.constant 0 : index
    %c0_8 = arith.constant 0 : index
    %c0_9 = arith.constant 0 : index
    %23 = vector.load %arg4[%c0_7, %c0_8, %c0_9] : memref<4x8x128xf32, #tpu.memory_space<vmem>>, vector<1x8x128xf32>
    %24 = vector.shape_cast %23 : vector<1x8x128xf32> to vector<8x128xf32>
    %25 = vector.shape_cast %8 : vector<16x128xf32> to vector<2x8x128xf32>
    %cst_10 = arith.constant dense<0.000000e+00> : vector<8x128xf32>
    %26 = vector.multi_reduction <add>, %25, %cst_10 [0] : vector<2x8x128xf32> to vector<8x128xf32>
    %27 = arith.addf %24, %26 : vector<8x128xf32>
    %c0_11 = arith.constant 0 : index
    %c0_12 = arith.constant 0 : index
    %c0_13 = arith.constant 0 : index
    %28 = vector.load %arg4[%c0_11, %c0_12, %c0_13] : memref<4x8x128xf32, #tpu.memory_space<vmem>>, vector<1x8x128xf32>
    %29 = vector.shape_cast %28 : vector<1x8x128xf32> to vector<8x128xf32>
    %30 = vector.shape_cast %27 : vector<8x128xf32> to vector<1x8x128xf32>
    tpu.vector_store %arg4[%c0_11, %c0_12, %c0_13], %30 {strides = array<i32>} : memref<4x8x128xf32, #tpu.memory_space<vmem>>, vector<1x8x128xf32>,
    %c1 = arith.constant 1 : index
    %c0_14 = arith.constant 0 : index
    %c0_15 = arith.constant 0 : index
    %31 = vector.load %arg4[%c1, %c0_14, %c0_15] : memref<4x8x128xf32, #tpu.memory_space<vmem>>, vector<1x8x128xf32>
    %32 = vector.shape_cast %31 : vector<1x8x128xf32> to vector<8x128xf32>
    %33 = vector.shape_cast %12 : vector<16x128xf32> to vector<2x8x128xf32>
    %cst_16 = arith.constant dense<0.000000e+00> : vector<8x128xf32>
    %34 = vector.multi_reduction <add>, %33, %cst_16 [0] : vector<2x8x128xf32> to vector<8x128xf32>
    %35 = arith.addf %32, %34 : vector<8x128xf32>
    %c1_17 = arith.constant 1 : index
    %c0_18 = arith.constant 0 : index
    %c0_19 = arith.constant 0 : index
    %36 = vector.load %arg4[%c1_17, %c0_18, %c0_19] : memref<4x8x128xf32, #tpu.memory_space<vmem>>, vector<1x8x128xf32>
    %37 = vector.shape_cast %36 : vector<1x8x128xf32> to vector<8x128xf32>
    %38 = vector.shape_cast %35 : vector<8x128xf32> to vector<1x8x128xf32>
    tpu.vector_store %arg4[%c1_17, %c0_18, %c0_19], %38 {strides = array<i32>} : memref<4x8x128xf32, #tpu.memory_space<vmem>>, vector<1x8x128xf32>,
    %c2 = arith.constant 2 : index
    %c0_20 = arith.constant 0 : index
    %c0_21 = arith.constant 0 : index
    %39 = vector.load %arg4[%c2, %c0_20, %c0_21] : memref<4x8x128xf32, #tpu.memory_space<vmem>>, vector<1x8x128xf32>
    %40 = vector.shape_cast %39 : vector<1x8x128xf32> to vector<8x128xf32>
    %41 = arith.mulf %22, %8 : vector<16x128xf32>
    %42 = vector.shape_cast %41 : vector<16x128xf32> to vector<2x8x128xf32>
    %cst_22 = arith.constant dense<0.000000e+00> : vector<8x128xf32>
    %43 = vector.multi_reduction <add>, %42, %cst_22 [0] : vector<2x8x128xf32> to vector<8x128xf32>
    %44 = arith.addf %40, %43 : vector<8x128xf32>
    %c2_23 = arith.constant 2 : index
    %c0_24 = arith.constant 0 : index
    %c0_25 = arith.constant 0 : index
    %45 = vector.load %arg4[%c2_23, %c0_24, %c0_25] : memref<4x8x128xf32, #tpu.memory_space<vmem>>, vector<1x8x128xf32>
    %46 = vector.shape_cast %45 : vector<1x8x128xf32> to vector<8x128xf32>
    %47 = vector.shape_cast %44 : vector<8x128xf32> to vector<1x8x128xf32>
    tpu.vector_store %arg4[%c2_23, %c0_24, %c0_25], %47 {strides = array<i32>} : memref<4x8x128xf32, #tpu.memory_space<vmem>>, vector<1x8x128xf32>,
    %c3 = arith.constant 3 : index
    %c0_26 = arith.constant 0 : index
    %c0_27 = arith.constant 0 : index
    %48 = vector.load %arg4[%c3, %c0_26, %c0_27] : memref<4x8x128xf32, #tpu.memory_space<vmem>>, vector<1x8x128xf32>
    %49 = vector.shape_cast %48 : vector<1x8x128xf32> to vector<8x128xf32>
    %50 = arith.mulf %22, %12 : vector<16x128xf32>
    %51 = vector.shape_cast %50 : vector<16x128xf32> to vector<2x8x128xf32>
    %cst_28 = arith.constant dense<0.000000e+00> : vector<8x128xf32>
    %52 = vector.multi_reduction <add>, %51, %cst_28 [0] : vector<2x8x128xf32> to vector<8x128xf32>
    %53 = arith.addf %49, %52 : vector<8x128xf32>
    %c3_29 = arith.constant 3 : index
    %c0_30 = arith.constant 0 : index
    %c0_31 = arith.constant 0 : index
    %54 = vector.load %arg4[%c3_29, %c0_30, %c0_31] : memref<4x8x128xf32, #tpu.memory_space<vmem>>, vector<1x8x128xf32>
    %55 = vector.shape_cast %54 : vector<1x8x128xf32> to vector<8x128xf32>
    %56 = vector.shape_cast %53 : vector<8x128xf32> to vector<1x8x128xf32>
    tpu.vector_store %arg4[%c3_29, %c0_30, %c0_31], %56 {strides = array<i32>} : memref<4x8x128xf32, #tpu.memory_space<vmem>>, vector<1x8x128xf32>,
    %c0_i32_32 = arith.constant 0 : i32
    %57 = arith.cmpi eq, %arg0, %c0_i32_32 : i32
    %58 = arith.extui %57 : i1 to i32
    %c0_i32_33 = arith.constant 0 : i32
    %59 = arith.cmpi ne, %58, %c0_i32_33 : i32
    scf.if %59 {
      %c0_34 = arith.constant 0 : index
      %c0_35 = arith.constant 0 : index
      %c0_36 = arith.constant 0 : index
      %60 = vector.load %arg4[%c0_34, %c0_35, %c0_36] : memref<4x8x128xf32, #tpu.memory_space<vmem>>, vector<1x8x128xf32>
      %61 = vector.shape_cast %60 : vector<1x8x128xf32> to vector<8x128xf32>
      %62 = vector.shape_cast %61 : vector<8x128xf32> to vector<1x8x128xf32>
      %cst_37 = arith.constant dense<0.000000e+00> : vector<1xf32>
      %63 = vector.multi_reduction <add>, %62, %cst_37 [1, 2] : vector<1x8x128xf32> to vector<1xf32>
      %64 = vector.shape_cast %63 : vector<1xf32> to vector<1x1x1xf32>
      %65 = vector.extract %64[0, 0, 0] : f32 from vector<1x1x1xf32>
      %c1_38 = arith.constant 1 : index
      %c0_39 = arith.constant 0 : index
      %c0_40 = arith.constant 0 : index
      %66 = vector.load %arg4[%c1_38, %c0_39, %c0_40] : memref<4x8x128xf32, #tpu.memory_space<vmem>>, vector<1x8x128xf32>
      %67 = vector.shape_cast %66 : vector<1x8x128xf32> to vector<8x128xf32>
      %68 = vector.shape_cast %67 : vector<8x128xf32> to vector<1x8x128xf32>
      %cst_41 = arith.constant dense<0.000000e+00> : vector<1xf32>
      %69 = vector.multi_reduction <add>, %68, %cst_41 [1, 2] : vector<1x8x128xf32> to vector<1xf32>
      %70 = vector.shape_cast %69 : vector<1xf32> to vector<1x1x1xf32>
      %71 = vector.extract %70[0, 0, 0] : f32 from vector<1x1x1xf32>
      %72 = arith.addf %65, %71 : f32
      %73 = arith.divf %71, %72 : f32
      %cst_42 = arith.constant 1.100000e+00 : f32
      %74 = arith.mulf %cst_42, %65 : f32
      %75 = arith.divf %74, %72 : f32
      %c2_43 = arith.constant 2 : index
      %c0_44 = arith.constant 0 : index
      %c0_45 = arith.constant 0 : index
      %76 = vector.load %arg4[%c2_43, %c0_44, %c0_45] : memref<4x8x128xf32, #tpu.memory_space<vmem>>, vector<1x8x128xf32>
      %77 = vector.shape_cast %76 : vector<1x8x128xf32> to vector<8x128xf32>
      %78 = vector.shape_cast %77 : vector<8x128xf32> to vector<1x8x128xf32>
      %cst_46 = arith.constant dense<0.000000e+00> : vector<1xf32>
      %79 = vector.multi_reduction <add>, %78, %cst_46 [1, 2] : vector<1x8x128xf32> to vector<1xf32>
      %80 = vector.shape_cast %79 : vector<1xf32> to vector<1x1x1xf32>
      %81 = vector.extract %80[0, 0, 0] : f32 from vector<1x1x1xf32>
      %82 = arith.mulf %73, %81 : f32
      %c3_47 = arith.constant 3 : index
      %c0_48 = arith.constant 0 : index
      %c0_49 = arith.constant 0 : index
      %83 = vector.load %arg4[%c3_47, %c0_48, %c0_49] : memref<4x8x128xf32, #tpu.memory_space<vmem>>, vector<1x8x128xf32>
      %84 = vector.shape_cast %83 : vector<1x8x128xf32> to vector<8x128xf32>
      %85 = vector.shape_cast %84 : vector<8x128xf32> to vector<1x8x128xf32>
      %cst_50 = arith.constant dense<0.000000e+00> : vector<1xf32>
      %86 = vector.multi_reduction <add>, %85, %cst_50 [1, 2] : vector<1x8x128xf32> to vector<1xf32>
      %87 = vector.shape_cast %86 : vector<1xf32> to vector<1x1x1xf32>
      %88 = vector.extract %87[0, 0, 0] : f32 from vector<1x1x1xf32>
      %89 = arith.mulf %75, %88 : f32
      %90 = arith.addf %82, %89 : f32
      %cst_51 = arith.constant 4.8828125E-4 : f32
      %91 = arith.mulf %90, %cst_51 : f32
      %c0_52 = arith.constant 0 : index
      %c0_53 = arith.constant 0 : index
      %92 = memref.load %arg3[%c0_52, %c0_53] : memref<1x1xf32, #tpu.memory_space<smem>>
      memref.store %91, %arg3[%c0_52, %c0_53] : memref<1x1xf32, #tpu.memory_space<smem>>
    } else {
    }
    return
  }
  func.func @transform_0(%arg0: i32) -> (i32, i32) {
    %c0_i32 = arith.constant 0 : i32
    %c0_i32_0 = arith.constant 0 : i32
    return %arg0, %c0_i32 : i32, i32
  }
  func.func @transform_1(%arg0: i32) -> (i32, i32) {
    %c0_i32 = arith.constant 0 : i32
    %c0_i32_0 = arith.constant 0 : i32
    return %arg0, %c0_i32 : i32, i32
  }
  func.func @transform_2(%arg0: i32) -> (i32, i32) {
    %c0_i32 = arith.constant 0 : i32
    %c0_i32_0 = arith.constant 0 : i32
    %c0_i32_1 = arith.constant 0 : i32
    return %c0_i32, %c0_i32_0 : i32, i32
  }
}

</mosaic_0001>

<llo_original>
// kernel: tpu_custom_call.1
$region0: #{tpu_custom_call.1}
  #allocation0 [shape = 'u32[]', space=smem, size = 0x4, offset = 0x4, fixed_abs, tag = 'smem constant byte address 0x4 - core index']
  #allocation1 [shape = 'u32[144,128]{1,0:T(1,128)}', space=vmem, size = 0x12000, scoped, tag = 'internal scratch']
  #allocation2 [shape = 'f32[4,8,128]{2,1,0:T(8,128)}', space=vmem, size = 0x4000, scoped, tag = 'scratch operand']
  %s0 = inlined_call_operand.hbm [shape: f32[16,128], index: 0, kind: input, shape index: {}]
  %s1 = inlined_call_operand.hbm [shape: f32[16,128], index: 1, kind: input, shape index: {}]
  %s2 = inlined_call_operand.hbm [shape: f32[1,1], index: 2, kind: output, shape index: {}]
  %s3 = sld [smem:[#allocation0]]
  $region34: #{tpu_custom_call.1} parent=0
    _
  %s5 = ssub.s32 1, %s3
  %s6 = scalar_select 0, %s5, %s3
  $region1: #{tpu_custom_call.1} parent=0
    #allocation3 [shape = 'u8[8192]{0}', space=vmem, size = 0x2000, scoped, tag = 'input window, operand 0, single buffered']
    #allocation4 [shape = 's32[1]{0}', space=sflag, size = 0x4, scoped, tag = 'scoped memory for tpu_custom_call.1']
    #allocation5 [shape = 's32[1]{0}', space=sflag, size = 0x4, scoped, tag = 'scoped memory for tpu_custom_call.1']
    #allocation6 [shape = 'u8[8192]{0}', space=vmem, size = 0x2000, scoped, tag = 'input window, operand 1, single buffered']
    #allocation7 [shape = 's32[1]{0}', space=sflag, size = 0x4, scoped, tag = 'scoped memory for tpu_custom_call.1']
    #allocation8 [shape = 'u8[512]{0}', space=smem, size = 0x200, scoped, tag = 'output window, operand 0, single buffered']
    %7 = vsyncpa [#allocation4], 0
    %8 = vsyncpa [#allocation7], 0
    %9 = vsyncpa [#allocation5], 0
    // Predicated region
    $region2: #{tpu_custom_call.1} parent=1 // pred_check
      _
    $region3: #{tpu_custom_call.1} parent=1 // pred_check_branch
      %11 = sbr.rel (0) target = $region5
    $region4: #{tpu_custom_call.1} parent=1 // pred_region
      %s13 = ssub.s32 256, 256
      %14 = vsyncadd [#allocation4], %s13
      %s15 = sshll.u32 [#allocation3], 4
      %s16 = int_to_ptr.vmem [resolvable:$true] %s15
      %21 = dma.hbm_to_vmem [thread:$0]  %s0, 256, %s16, [#allocation4], 128, 128, 8
    $region5: #{tpu_custom_call.1} parent=1 // pred_fallthru
      _
    // Predicated region
    $region6: #{tpu_custom_call.1} parent=1 // pred_check
      _
    $region7: #{tpu_custom_call.1} parent=1 // pred_check_branch
      %23 = sbr.rel (0) target = $region9
    $region8: #{tpu_custom_call.1} parent=1 // pred_region
      %s25 = ssub.s32 256, 256
      %26 = vsyncadd [#allocation7], %s25
      %s27 = sshll.u32 [#allocation6], 4
      %s28 = int_to_ptr.vmem [resolvable:$true] %s27
      %33 = dma.hbm_to_vmem [thread:$0]  %s1, 256, %s28, [#allocation7], 128, 128, 8
    $region9: #{tpu_custom_call.1} parent=1 // pred_fallthru
      _
    // Predicated region
    $region10: #{tpu_custom_call.1} parent=1 // pred_check
      _
    $region11: #{tpu_custom_call.1} parent=1 // pred_check_branch
      %35 = sbr.rel (0) target = $region13
    $region12: #{tpu_custom_call.1} parent=1 // pred_region
      %36 = dma.done [#allocation4], 256
    $region13: #{tpu_custom_call.1} parent=1 // pred_fallthru
      _
    // Predicated region
    $region14: #{tpu_custom_call.1} parent=1 // pred_check
      _
    $region15: #{tpu_custom_call.1} parent=1 // pred_check_branch
      %38 = sbr.rel (0) target = $region17
    $region16: #{tpu_custom_call.1} parent=1 // pred_region
      %39 = dma.done [#allocation7], 256
    $region17: #{tpu_custom_call.1} parent=1 // pred_fallthru
      _
    %p40 = scmp.eq.s32.totalorder 0, 0
    // Predicated region
    $region18: #{tpu_custom_call.1} parent=1 // pred_check
      %p41 = pneg %p40
    $region19: #{tpu_custom_call.1} parent=1 // pred_check_branch
      %43 = sbr.rel (%p41) target = $region21
    $region20: #{tpu_custom_call.1} parent=1 // pred_region
      %44 = vst [vmem:[#allocation2] sm:$0xff] 0.0
      %45 = vst [vmem:[#allocation2 + $0x8] sm:$0xff] 0.0
      %46 = vst [vmem:[#allocation2 + $0x10] sm:$0xff] 0.0
      %47 = vst [vmem:[#allocation2 + $0x18] sm:$0xff] 0.0
    $region21: #{tpu_custom_call.1} parent=1 // pred_fallthru
      _
    %v48 = vld [vmem:[#allocation3] sm:$0xff]
    %v49 = vld [vmem:[#allocation3 + $0x8] sm:$0xff]
    %v50 = vld [vmem:[#allocation6] sm:$0xff]
    %v51 = vld [vmem:[#allocation6 + $0x8] sm:$0xff]
    %vm52 = vcmp.eq.f32.partialorder %v50, 1.0
    %vm53 = vcmp.eq.f32.partialorder %v51, 1.0
    %v54 = vsel %vm52, 1, 0
    %v55 = vsel %vm53, 1, 0
    %v56 = vcvt.s32.f32 %v54
    %v57 = vcvt.s32.f32 %v55
    %vm58 = vcmp.eq.f32.partialorder %v50, 0.0
    %vm59 = vcmp.eq.f32.partialorder %v51, 0.0
    %v60 = vsel %vm58, 1, 0
    %v61 = vsel %vm59, 1, 0
    %v62 = vcvt.s32.f32 %v60
    %v63 = vcvt.s32.f32 %v61
    %v64 = vmax.f32 %v48, 0.0
    %v65 = vmax.f32 %v49, 0.0
    %v66 = vmul.f32 %v48, %v50
    %v67 = vmul.f32 %v49, %v51
    %v68 = vsub.f32 %v64, %v66
    %v69 = vsub.f32 %v65, %v67
    %v70 = vand.u32 2147483647, %v48
    %v71 = vand.u32 2147483647, %v49
    %v72 = vsub.f32 0.0, %v70
    %v73 = vsub.f32 0.0, %v71
    %v74 = vmul.f32 %v72, 1.442695
    %v75 = vpow.pop %v74
    %v76 = vmul.f32 %v73, 1.442695
    %v77 = vpow.pop %v76
    %v78 = vadd.f32 %v75, 1.0
    %v79 = vlog2.pop %v78
    %v80 = vmul.f32 %v79, 0.6931472
    %v81 = vmul.f32 -0.5, %v75
    %v82 = vadd.f32 %v81, 1.0
    %v83 = vmul.f32 %v82, %v75
    %v84 = vand.u32 2147483647, %v75
    %vm85 = vcmp.lt.f32.partialorder %v84, 0.0004427343
    %v86 = vsel %vm85, %v83, %v80
    %v87 = vadd.f32 %v77, 1.0
    %v88 = vlog2.pop %v87
    %v89 = vmul.f32 %v88, 0.6931472
    %v90 = vmul.f32 -0.5, %v77
    %v91 = vadd.f32 %v90, 1.0
    %v92 = vmul.f32 %v91, %v77
    %v93 = vand.u32 2147483647, %v77
    %vm94 = vcmp.lt.f32.partialorder %v93, 0.0004427343
    %v95 = vsel %vm94, %v92, %v89
    %v96 = vadd.f32 %v68, %v86
    %v97 = vadd.f32 %v69, %v95
    %v98 = vld [vmem:[#allocation2] sm:$0xff]
    %v99 = vadd.f32 %v56, %v57
    %v100 = vadd.f32 %v98, %v99
    %101 = vst [vmem:[#allocation2] sm:$0xff] %v100
    %s102 = scalar_lea.vmem [#allocation2], 8
    %v103 = vld [vmem:[%s102] sm:$0xff]
    %v104 = vadd.f32 %v62, %v63
    %v105 = vadd.f32 %v103, %v104
    %106 = vst [vmem:[%s102] sm:$0xff] %v105
    %s107 = scalar_lea.vmem [#allocation2], 16
    %v108 = vld [vmem:[%s107] sm:$0xff]
    %v109 = vmul.f32 %v96, %v56
    %v110 = vmul.f32 %v97, %v57
    %v111 = vadd.f32 %v109, %v110
    %v112 = vadd.f32 %v108, %v111
    %113 = vst [vmem:[%s107] sm:$0xff] %v112
    %s114 = scalar_lea.vmem [#allocation2], 24
    %v115 = vld [vmem:[%s114] sm:$0xff]
    %v116 = vmul.f32 %v96, %v62
    %v117 = vmul.f32 %v97, %v63
    %v118 = vadd.f32 %v116, %v117
    %v119 = vadd.f32 %v115, %v118
    %120 = vst [vmem:[%s114] sm:$0xff] %v119
    // Predicated region
    $region22: #{tpu_custom_call.1} parent=1 // pred_check
      %p121 = pneg %p40
    $region23: #{tpu_custom_call.1} parent=1 // pred_check_branch
      %123 = sbr.rel (%p121) target = $region25
    $region24: #{tpu_custom_call.1} parent=1 // pred_region
      %v124 = vld [vmem:[#allocation2] sm:$0xff]
      %125 = vadd.xlane.f32.xlu0 %v124
      %v126 = vpop.xlane.xlu0 %125
      %v127 = vrot.slane %v126, 4
      %v128 = vadd.f32 %v126, %v127
      %v129 = vrot.slane %v128, 2
      %v130 = vadd.f32 %v128, %v129
      %v131 = vrot.slane %v130, 1
      %v132 = vadd.f32 %v130, %v131
      %s133 = vtos %v132
      %v134 = vld [vmem:[%s102] sm:$0xff]
      %135 = vadd.xlane.f32.xlu0 %v134
      %v136 = vpop.xlane.xlu0 %135
      %v137 = vrot.slane %v136, 4
      %v138 = vadd.f32 %v136, %v137
      %v139 = vrot.slane %v138, 2
      %v140 = vadd.f32 %v138, %v139
      %v141 = vrot.slane %v140, 1
      %v142 = vadd.f32 %v140, %v141
      %s143 = vtos %v142
      %s144 = sadd.f32 %s133, %s143
      %v145 = vstv %s144
      %v146 = vrcp.pop %v145
      %s147 = vtos %v146
      %s148 = smul.f32 %s143, %s147
      %s149 = smul.f32 %s133, 1.1
      %v150 = vstv %s144
      %v151 = vrcp.pop %v150
      %s152 = vtos %v151
      %s153 = smul.f32 %s149, %s152
      %v154 = vld [vmem:[%s107] sm:$0xff]
      %155 = vadd.xlane.f32.xlu0 %v154
      %v156 = vpop.xlane.xlu0 %155
      %v157 = vrot.slane %v156, 4
      %v158 = vadd.f32 %v156, %v157
      %v159 = vrot.slane %v158, 2
      %v160 = vadd.f32 %v158, %v159
      %v161 = vrot.slane %v160, 1
      %v162 = vadd.f32 %v160, %v161
      %s163 = vtos %v162
      %s164 = smul.f32 %s148, %s163
      %v165 = vld [vmem:[%s114] sm:$0xff]
      %166 = vadd.xlane.f32.xlu0 %v165
      %v167 = vpop.xlane.xlu0 %166
      %v168 = vrot.slane %v167, 4
      %v169 = vadd.f32 %v167, %v168
      %v170 = vrot.slane %v169, 2
      %v171 = vadd.f32 %v169, %v170
      %v172 = vrot.slane %v171, 1
      %v173 = vadd.f32 %v171, %v172
      %s174 = vtos %v173
      %s175 = smul.f32 %s153, %s174
      %s176 = sadd.f32 %s164, %s175
      %s177 = smul.f32 %s176, 0.00048828125
      %s178 = scalar_lea.smem [#allocation8], 0
      %179 = sst [smem:[%s178]] %s177
    $region25: #{tpu_custom_call.1} parent=1 // pred_fallthru
      _
    // Predicated region
    $region26: #{tpu_custom_call.1} parent=1 // pred_check
      _
    $region27: #{tpu_custom_call.1} parent=1 // pred_check_branch
      %181 = sbr.rel (0) target = $region29
    $region28: #{tpu_custom_call.1} parent=1 // pred_region
      %s183 = ssub.s32 16, 16
      %184 = vsyncadd [#allocation5], %s183
      %187 = dma.smem_to_hbm [#allocation8], 16, %s2, [#allocation5]
    $region29: #{tpu_custom_call.1} parent=1 // pred_fallthru
      _
    // Predicated region
    $region30: #{tpu_custom_call.1} parent=1 // pred_check
      _
    $region31: #{tpu_custom_call.1} parent=1 // pred_check_branch
      %189 = sbr.rel (0) target = $region33
    $region32: #{tpu_custom_call.1} parent=1 // pred_region
      %190 = dma.done [#allocation5], 16
    $region33: #{tpu_custom_call.1} parent=1 // pred_fallthru
      _
    %191 = sfence
    %192 = vsyncpa [#allocation4], 1
    %193 = vsyncpa [#allocation7], 1
    %194 = vsyncpa [#allocation5], 1

</llo_original>
